<compile_context>
chip_gen: v7x
topology: tpu7x:2x2x1
jax: 0.10.0
libtpu: 0.0.40
codegen_flags: <defaults>
</compile_context>

<pallas_src>
import jax
import jax.numpy as jnp
from jax import lax
from jax.experimental import pallas as pl
from jax.experimental.pallas import tpu as pltpu


def _round_up(x, m):
    return ((x + m - 1) // m) * m


def _sublane_pack(dtype):
    # Rows per packed sublane tile: f32 -> 8, bf16 -> 16, int8/fp8 -> 32.
    return max(8, 32 // jnp.dtype(dtype).itemsize)


def _vmem_capacity_bytes():
    try:
        return int(pltpu.get_tpu_info().vmem_capacity_bytes)
    except Exception:
        # Conservative fallback (v7x per-TC VMEM).
        return 64 * 1024 * 1024


def _default_tiles(vmem_bytes):
    """Chip-generation-aware default (tm, tn, tk)."""
    if vmem_bytes >= 96 * 1024 * 1024:
        # v5e / v6e (128 MiB VMEM): big tiles push past the MXU/HBM balance
        # point (~650 flop/byte on v6e); ~36 MiB double-buffered VMEM.
        return 1024, 2048, 1024
    # v7x (64 MiB VMEM, much better HBM:MXU ratio): smaller tiles already hit
    # roofline (~12-16 MiB VMEM).
    return 512, 1024, 1024


def _linear_kernel(x_ref, w_ref, b_ref, o_ref, acc_ref):
    """One (tm, tn) output tile; K is tiled along grid axis 2 (innermost).

    x_ref:   (tm, tk)  activations (compute dtype)
    w_ref:   (tn, tk)  nn.Linear weight tile, un-transposed (compute dtype)
    b_ref:   (1, tn)   bias row (f32)
    o_ref:   (tm, tn)  output tile (original dtype)
    acc_ref: (tm, tn)  f32 accumulator scratch (persists across K steps)
    """
    k = pl.program_id(2)

    @pl.when(k == 0)
    def _():
        # Seed the accumulator with the bias: folds the bias add into init.
        acc_ref[...] = jnp.broadcast_to(b_ref[...], acc_ref.shape)

    # Contract x's feature dim with the weight's feature dim:
    # (tm, tk) x (tn, tk) -> (tm, tn); MXU-native, f32 accumulation.
    acc_ref[...] += lax.dot_general(
        x_ref[...], w_ref[...],
        dimension_numbers=(((1,), (1,)), ((), ())),
        preferred_element_type=jnp.float32,
    )

    @pl.when(k == pl.num_programs(2) - 1)
    def _():
        o_ref[...] = acc_ref[...].astype(o_ref.dtype)


class Generator:
    """Pallas/TPU equivalent of the PyTorch `Generator` module (nn.Linear).

    Weight cast + padding happens once at construction, so the per-call cost
    is only the (much smaller) activation pad/cast and the matmul kernel.
    """

    def __init__(self, weight, bias, *, compute_dtype=jnp.bfloat16,
                 tm=None, tn=None, tk=None):
        assert weight.ndim == 2 and bias.ndim == 1
        self.out_dim, self.d_model = weight.shape
        assert bias.shape[0] == self.out_dim
        self.compute_dtype = jnp.dtype(compute_dtype)

        self._vmem = _vmem_capacity_bytes()
        d_tm, d_tn, d_tk = _default_tiles(self._vmem)
        self.tm_default = int(tm or d_tm)
        # Clamp N/K tiles to the 128-rounded problem dims once, at init.
        self.tn = min(int(tn or d_tn), _round_up(self.out_dim, 128))
        self.tk = min(int(tk or d_tk), _round_up(self.d_model, 128))
        self.np_ = _round_up(self.out_dim, self.tn)
        self.kp = _round_up(self.d_model, self.tk)

        # One-time weight cast + zero pad (keeps nn.Linear [out, in] layout).
        w = jnp.asarray(weight).astype(self.compute_dtype)
        if self.np_ != self.out_dim or self.kp != self.d_model:
            w = jnp.pad(w, ((0, self.np_ - self.out_dim),
                            (0, self.kp - self.d_model)))
        b = jnp.asarray(bias).astype(jnp.float32).reshape(1, self.out_dim)
        if self.np_ != self.out_dim:
            b = jnp.pad(b, ((0, 0), (0, self.np_ - self.out_dim)))
        self.w = w
        self.b = b

    def __call__(self, x):
        orig_dtype = x.dtype
        *lead, d_model = x.shape
        assert d_model == self.d_model, (d_model, self.d_model)
        m = 1
        for s in lead:
            m *= s

        # M tile: round to the compute dtype's sublane pack, clamp to default.
        pack = _sublane_pack(self.compute_dtype)
        tm = min(self.tm_default, _round_up(m, pack))
        mp = _round_up(m, tm)

        tn, tk, np_, kp = self.tn, self.tk, self.np_, self.kp

        x2d = x.reshape(m, d_model).astype(self.compute_dtype)
        if mp != m or kp != d_model:
            x2d = jnp.pad(x2d, ((0, mp - m), (0, kp - d_model)))

        grid = (mp // tm, np_ // tn, kp // tk)

        cbytes = self.compute_dtype.itemsize
        obytes = jnp.dtype(orig_dtype).itemsize
        # Double-buffered input/output tiles + f32 accumulator scratch + bias.
        vmem_needed = (2 * (tm * tk + tn * tk) * cbytes
                       + 2 * tn * 4
                       + 2 * tm * tn * obytes
                       + tm * tn * 4)
        vmem_limit = max(32 * 1024 * 1024, int(vmem_needed * 3 // 2))
        # Never exceed this chip's physical VMEM (minus headroom) — important
        # on v7x where physical VMEM is only 64 MiB.
        vmem_limit = int(min(vmem_limit, self._vmem - 4 * 1024 * 1024))

        y2d = pl.pallas_call(
            _linear_kernel,
            out_shape=jax.ShapeDtypeStruct((mp, np_), orig_dtype),
            grid_spec=pltpu.PrefetchScalarGridSpec(
                num_scalar_prefetch=0,
                grid=grid,
                in_specs=[
                    pl.BlockSpec((tm, tk), lambda i, j, k: (i, k)),  # x tile
                    pl.BlockSpec((tn, tk), lambda i, j, k: (j, k)),  # W tile
                    pl.BlockSpec((1, tn), lambda i, j, k: (0, j)),   # bias row
                ],
                out_specs=pl.BlockSpec((tm, tn), lambda i, j, k: (i, j)),
                scratch_shapes=[pltpu.VMEM((tm, tn), jnp.float32)],
            ),
            compiler_params=pltpu.CompilerParams(
                dimension_semantics=("parallel", "parallel", "arbitrary"),
                vmem_limit_bytes=vmem_limit,
            ),
            cost_estimate=pl.CostEstimate(
                flops=2 * mp * kp * np_,
                transcendentals=0,
                bytes_accessed=int((mp * kp + np_ * kp) * cbytes
                                   + mp * np_ * obytes + np_ * 4),
            ),
        )(x2d, self.w, self.b)

        y2d = y2d[:m, :self.out_dim]
        return y2d.reshape(*lead, self.out_dim)


def generator_forward(x, weight, bias, **kwargs):
    """Functional convenience wrapper (builds the module then applies it)."""
    return Generator(weight, bias, **kwargs)(x)


if __name__ == "__main__":
    # Small, deterministic setup consistent with the module:
    # d_model=32, out_dim=16, x: [batch=2, seq=8, d_model=32]
    d_model, out_dim = 32, 16
    batch, seq = 2, 8

    key = jax.random.PRNGKey(0)
    kx, kw, kb = jax.random.split(key, 3)

    x = jax.random.normal(kx, (batch, seq, d_model), dtype=jnp.float32)
    # nn.Linear-style params: weight [out_dim, d_model], bias [out_dim]
    bound = 1.0 / (d_model ** 0.5)
    weight = jax.random.uniform(kw, (out_dim, d_model), dtype=jnp.float32,
                                minval=-bound, maxval=bound)
    bias = jax.random.uniform(kb, (out_dim,), dtype=jnp.float32,
                              minval=-bound, maxval=bound)

    y_ref = x @ weight.T + bias

    # 1) Full-precision path (f32 MXU inputs, f32 accumulation) — tight check.
    gen_f32 = Generator(weight, bias, compute_dtype=jnp.float32)
    y = jax.block_until_ready(gen_f32(x))
    assert y.shape == (batch, seq, out_dim), y.shape
    assert jnp.allclose(y, y_ref, atol=1e-5, rtol=1e-5), "f32 path mismatch vs reference"

    # 2) Default bf16 MXU path (f32 accumulation) — looser tolerance.
    gen_bf16 = Generator(weight, bias)  # compute_dtype defaults to bf16
    y_bf16 = jax.block_until_ready(gen_bf16(x))
    assert y_bf16.shape == (batch, seq, out_dim), y_bf16.shape
    assert jnp.allclose(y_bf16, y_ref, atol=5e-2, rtol=5e-2), "bf16 path mismatch vs reference"

    print("KERNEL_OK")
</pallas_src>

<mosaic_0001>
module attributes {stable_mosaic.version = 11 : i64} {
  func.func @_linear_kernel(%arg0: i32, %arg1: i32, %arg2: i32, %arg3: memref<16x128xf32, #tpu.memory_space<vmem>>, %arg4: memref<128x128xf32, #tpu.memory_space<vmem>>, %arg5: memref<1x128xf32, #tpu.memory_space<vmem>>, %arg6: memref<16x128xf32, #tpu.memory_space<vmem>>, %arg7: memref<16x128xf32, #tpu.memory_space<vmem>>) attributes {dimension_semantics = [#tpu.dimension_semantics<parallel>, #tpu.dimension_semantics<parallel>, #tpu.dimension_semantics<arbitrary>], iteration_bounds = array<i64: 1, 1, 1>, scalar_prefetch = 0 : i64, scratch_operands = 1 : i64, tpu.core_type = #tpu.core_type<tc>, window_params = [{transform_indices = @transform_0, window_bounds = array<i64: 16, 128>}, {transform_indices = @transform_1, window_bounds = array<i64: 128, 128>}, {transform_indices = @transform_2, window_bounds = array<i64: 1, 128>}, {transform_indices = @transform_3, window_bounds = array<i64: 16, 128>}]} {
    %c0_i32 = arith.constant 0 : i32
    %0 = arith.cmpi eq, %arg2, %c0_i32 : i32
    %1 = arith.extui %0 : i1 to i32
    %c0_i32_0 = arith.constant 0 : i32
    %2 = arith.cmpi ne, %1, %c0_i32_0 : i32
    scf.if %2 {
      %c0_10 = arith.constant 0 : index
      %c0_11 = arith.constant 0 : index
      %12 = vector.load %arg5[%c0_10, %c0_11] : memref<1x128xf32, #tpu.memory_space<vmem>>, vector<1x128xf32>
      %13 = vector.shape_cast %12 : vector<1x128xf32> to vector<1x128xf32>
      %14 = vector.broadcast %13 : vector<1x128xf32> to vector<16x128xf32>
      %c0_12 = arith.constant 0 : index
      %c0_13 = arith.constant 0 : index
      %15 = vector.load %arg7[%c0_12, %c0_13] : memref<16x128xf32, #tpu.memory_space<vmem>>, vector<16x128xf32>
      tpu.vector_store %arg7[%c0_12, %c0_13], %14 {strides = array<i32>} : memref<16x128xf32, #tpu.memory_space<vmem>>, vector<16x128xf32>,
    } else {
    }
    %c0 = arith.constant 0 : index
    %c0_1 = arith.constant 0 : index
    %3 = vector.load %arg7[%c0, %c0_1] : memref<16x128xf32, #tpu.memory_space<vmem>>, vector<16x128xf32>
    %c0_2 = arith.constant 0 : index
    %c0_3 = arith.constant 0 : index
    %4 = vector.load %arg3[%c0_2, %c0_3] : memref<16x128xf32, #tpu.memory_space<vmem>>, vector<16x128xf32>
    %c0_4 = arith.constant 0 : index
    %c0_5 = arith.constant 0 : index
    %5 = vector.load %arg4[%c0_4, %c0_5] : memref<128x128xf32, #tpu.memory_space<vmem>>, vector<128x128xf32>
    %cst = arith.constant dense<0.000000e+00> : vector<16x128xf32>
    %6 = tpu.matmul %4, %5, %cst {dimension_numbers = #tpu.dot_dimension_numbers<[1], [1], [0], [0], [0, 0, 1, 0], [], []>} : vector<16x128xf32>, vector<128x128xf32>, vector<16x128xf32> -> vector<16x128xf32>
    %7 = arith.addf %3, %6 : vector<16x128xf32>
    %c0_6 = arith.constant 0 : index
    %c0_7 = arith.constant 0 : index
    %8 = vector.load %arg7[%c0_6, %c0_7] : memref<16x128xf32, #tpu.memory_space<vmem>>, vector<16x128xf32>
    tpu.vector_store %arg7[%c0_6, %c0_7], %7 {strides = array<i32>} : memref<16x128xf32, #tpu.memory_space<vmem>>, vector<16x128xf32>,
    %c0_i32_8 = arith.constant 0 : i32
    %9 = arith.cmpi eq, %arg2, %c0_i32_8 : i32
    %10 = arith.extui %9 : i1 to i32
    %c0_i32_9 = arith.constant 0 : i32
    %11 = arith.cmpi ne, %10, %c0_i32_9 : i32
    scf.if %11 {
      %c0_10 = arith.constant 0 : index
      %c0_11 = arith.constant 0 : index
      %12 = vector.load %arg7[%c0_10, %c0_11] : memref<16x128xf32, #tpu.memory_space<vmem>>, vector<16x128xf32>
      %c0_12 = arith.constant 0 : index
      %c0_13 = arith.constant 0 : index
      %13 = vector.load %arg6[%c0_12, %c0_13] : memref<16x128xf32, #tpu.memory_space<vmem>>, vector<16x128xf32>
      tpu.vector_store %arg6[%c0_12, %c0_13], %12 {strides = array<i32>} : memref<16x128xf32, #tpu.memory_space<vmem>>, vector<16x128xf32>,
    } else {
    }
    return
  }
  func.func @transform_0(%arg0: i32, %arg1: i32, %arg2: i32) -> (i32, i32) {
    %c0_i32 = arith.constant 0 : i32
    return %arg0, %arg2 : i32, i32
  }
  func.func @transform_1(%arg0: i32, %arg1: i32, %arg2: i32) -> (i32, i32) {
    %c0_i32 = arith.constant 0 : i32
    return %arg1, %arg2 : i32, i32
  }
  func.func @transform_2(%arg0: i32, %arg1: i32, %arg2: i32) -> (i32, i32) {
    %c0_i32 = arith.constant 0 : i32
    %c0_i32_0 = arith.constant 0 : i32
    return %c0_i32, %arg1 : i32, i32
  }
  func.func @transform_3(%arg0: i32, %arg1: i32, %arg2: i32) -> (i32, i32) {
    %c0_i32 = arith.constant 0 : i32
    return %arg0, %arg1 : i32, i32
  }
}

</mosaic_0001>

<llo_original>
// kernel: tpu_custom_call.1
$region0: #{tpu_custom_call.1}
  #allocation0 [shape = 'u32[]', space=smem, size = 0x4, offset = 0x4, fixed_abs, tag = 'smem constant byte address 0x4 - core index']
  #allocation1 [shape = 'u32[144,128]{1,0:T(1,128)}', space=vmem, size = 0x12000, scoped, tag = 'internal scratch']
  #allocation2 [shape = 'f32[16,128]{1,0:T(8,128)}', space=vmem, size = 0x2000, scoped, tag = 'scratch operand']
  %s0 = inlined_call_operand.hbm [shape: f32[16,128], index: 0, kind: input, shape index: {}]
  %s1 = inlined_call_operand.hbm [shape: f32[128,128], index: 1, kind: input, shape index: {}]
  %s2 = inlined_call_operand.vmem [shape: f32[1,128], index: 2, kind: input, shape index: {}]
  %s3 = inlined_call_operand.hbm [shape: f32[16,128], index: 3, kind: output, shape index: {}]
  %s4 = sld [smem:[#allocation0]]
  $region38: #{tpu_custom_call.1} parent=0
    _
  %s6 = ssub.s32 1, %s4
  %s7 = scalar_select 0, %s6, %s4
  $region1: #{tpu_custom_call.1} parent=0
    #allocation3 [shape = 'u8[8192]{0}', space=vmem, size = 0x2000, scoped, tag = 'input window, operand 0, single buffered']
    #allocation4 [shape = 's32[1]{0}', space=sflag, size = 0x4, scoped, tag = 'scoped memory for tpu_custom_call.1']
    #allocation5 [shape = 's32[1]{0}', space=sflag, size = 0x4, scoped, tag = 'scoped memory for tpu_custom_call.1']
    #allocation6 [shape = 'u8[65536]{0}', space=vmem, size = 0x10000, scoped, tag = 'input window, operand 1, single buffered']
    #allocation7 [shape = 's32[1]{0}', space=sflag, size = 0x4, scoped, tag = 'scoped memory for tpu_custom_call.1']
    #allocation8 [shape = 'u8[8192]{0}', space=vmem, size = 0x2000, scoped, tag = 'output window, operand 0, single buffered']
    %8 = vsyncpa [#allocation4], 0
    %9 = vsyncpa [#allocation7], 0
    %10 = vsyncpa [#allocation5], 0
    // Predicated region
    $region2: #{tpu_custom_call.1} parent=1 // pred_check
      _
    $region3: #{tpu_custom_call.1} parent=1 // pred_check_branch
      %12 = sbr.rel (0) target = $region5
    $region4: #{tpu_custom_call.1} parent=1 // pred_region
      %s14 = ssub.s32 256, 256
      %15 = vsyncadd [#allocation4], %s14
      %s16 = sshll.u32 [#allocation3], 4
      %s17 = int_to_ptr.vmem [resolvable:$true] %s16
      %22 = dma.hbm_to_vmem [thread:$0]  %s0, 256, %s17, [#allocation4], 128, 128, 8
    $region5: #{tpu_custom_call.1} parent=1 // pred_fallthru
      _
    // Predicated region
    $region6: #{tpu_custom_call.1} parent=1 // pred_check
      _
    $region7: #{tpu_custom_call.1} parent=1 // pred_check_branch
      %24 = sbr.rel (0) target = $region9
    $region8: #{tpu_custom_call.1} parent=1 // pred_region
      %s26 = ssub.s32 2048, 2048
      %27 = vsyncadd [#allocation7], %s26
      %s28 = sshll.u32 [#allocation6], 4
      %s29 = int_to_ptr.vmem [resolvable:$true] %s28
      %34 = dma.hbm_to_vmem [thread:$0]  %s1, 2048, %s29, [#allocation7], 128, 128, 8
    $region9: #{tpu_custom_call.1} parent=1 // pred_fallthru
      _
    // Predicated region
    $region10: #{tpu_custom_call.1} parent=1 // pred_check
      _
    $region11: #{tpu_custom_call.1} parent=1 // pred_check_branch
      %36 = sbr.rel (0) target = $region13
    $region12: #{tpu_custom_call.1} parent=1 // pred_region
      _
    $region13: #{tpu_custom_call.1} parent=1 // pred_fallthru
      _
    // Predicated region
    $region14: #{tpu_custom_call.1} parent=1 // pred_check
      _
    $region15: #{tpu_custom_call.1} parent=1 // pred_check_branch
      %38 = sbr.rel (0) target = $region17
    $region16: #{tpu_custom_call.1} parent=1 // pred_region
      %39 = dma.done [#allocation4], 256
    $region17: #{tpu_custom_call.1} parent=1 // pred_fallthru
      _
    // Predicated region
    $region18: #{tpu_custom_call.1} parent=1 // pred_check
      _
    $region19: #{tpu_custom_call.1} parent=1 // pred_check_branch
      %41 = sbr.rel (0) target = $region21
    $region20: #{tpu_custom_call.1} parent=1 // pred_region
      %42 = dma.done [#allocation7], 2048
    $region21: #{tpu_custom_call.1} parent=1 // pred_fallthru
      _
    %p43 = scmp.eq.s32.totalorder 0, 0
    // Predicated region
    $region22: #{tpu_custom_call.1} parent=1 // pred_check
      %p44 = pneg %p43
    $region23: #{tpu_custom_call.1} parent=1 // pred_check_branch
      %46 = sbr.rel (%p44) target = $region25
    $region24: #{tpu_custom_call.1} parent=1 // pred_region
      %v47 = vld [vmem:[%s2] sm:$0x1]
      %v49 = vlaneseq
      %v50 = vshrl.u32 %v49, 7
      %v51 = vsub.s32 0, %v50
      %v52 = vrot.slane %v47, %v51
      %54 = vst [vmem:[#allocation2] sm:$0xff] %v52
      %55 = vst [vmem:[#allocation2 + $0x8] sm:$0xff] %v52
    $region25: #{tpu_custom_call.1} parent=1 // pred_fallthru
      _
    %v56 = vld [vmem:[#allocation2] sm:$0xff]
    %v57 = vld [vmem:[#allocation2 + $0x8] sm:$0xff]
    %v58 = vld [vmem:[#allocation3] sm:$0xff]
    %v59 = vld [vmem:[#allocation3 + $0x8] sm:$0xff]
    %v60 = vld [vmem:[#allocation6] sm:$0xff]
    %v61 = vld [vmem:[#allocation6 + $0x8] sm:$0xff]
    %v62 = vld [vmem:[#allocation6 + $0x10] sm:$0xff]
    %v63 = vld [vmem:[#allocation6 + $0x18] sm:$0xff]
    %v64 = vld [vmem:[#allocation6 + $0x20] sm:$0xff]
    %v65 = vld [vmem:[#allocation6 + $0x28] sm:$0xff]
    %v66 = vld [vmem:[#allocation6 + $0x30] sm:$0xff]
    %v67 = vld [vmem:[#allocation6 + $0x38] sm:$0xff]
    %v68 = vld [vmem:[#allocation6 + $0x40] sm:$0xff]
    %v69 = vld [vmem:[#allocation6 + $0x48] sm:$0xff]
    %v70 = vld [vmem:[#allocation6 + $0x50] sm:$0xff]
    %v71 = vld [vmem:[#allocation6 + $0x58] sm:$0xff]
    %v72 = vld [vmem:[#allocation6 + $0x60] sm:$0xff]
    %v73 = vld [vmem:[#allocation6 + $0x68] sm:$0xff]
    %v74 = vld [vmem:[#allocation6 + $0x70] sm:$0xff]
    %v75 = vld [vmem:[#allocation6 + $0x78] sm:$0xff]
    %76 = vmatprep.subr.mxu0 0.0
    %77 = vmatpush1.xpose.msra.mxu0 %v60
    %78 = vmatprep.subr.mxu0 0.0
    %79 = vmatpush1.xpose.msra.mxu0 %v61
    %80 = vmatprep.subr.mxu0 0.0
    %81 = vmatpush1.xpose.msra.mxu0 %v62
    %82 = vmatprep.subr.mxu0 0.0
    %83 = vmatpush1.xpose.msra.mxu0 %v63
    %84 = vmatprep.subr.mxu0 0.0
    %85 = vmatpush1.xpose.msra.mxu0 %v64
    %86 = vmatprep.subr.mxu0 0.0
    %87 = vmatpush1.xpose.msra.mxu0 %v65
    %88 = vmatprep.subr.mxu0 0.0
    %89 = vmatpush1.xpose.msra.mxu0 %v66
    %90 = vmatprep.subr.mxu0 0.0
    %91 = vmatpush1.xpose.msra.mxu0 %v67
    %92 = vmatprep.subr.mxu0 0.0
    %93 = vmatpush1.xpose.msra.mxu0 %v68
    %94 = vmatprep.subr.mxu0 0.0
    %95 = vmatpush1.xpose.msra.mxu0 %v69
    %96 = vmatprep.subr.mxu0 0.0
    %97 = vmatpush1.xpose.msra.mxu0 %v70
    %98 = vmatprep.subr.mxu0 0.0
    %99 = vmatpush1.xpose.msra.mxu0 %v71
    %100 = vmatprep.subr.mxu0 0.0
    %101 = vmatpush1.xpose.msra.mxu0 %v72
    %102 = vmatprep.subr.mxu0 0.0
    %103 = vmatpush1.xpose.msra.mxu0 %v73
    %104 = vmatprep.subr.mxu0 0.0
    %105 = vmatpush1.xpose.msra.mxu0 %v74
    %106 = vmatprep.subr.mxu0 0.0
    %107 = vmatpush1.xpose.msra.mxu0 %v75
    %108 = vmatprep.subr.mxu0 0.0
    %109 = vmatpush1.xpose.msra.mxu0 0.0
    %110 = vmatprep.subr.mxu0 0.0
    %111 = vmatpush1.xpose.msra.mxu0 0.0
    %112 = vmatprep.subr.mxu0 0.0
    %113 = vmatpush1.xpose.msra.mxu0 0.0
    %114 = vmatprep.subr.mxu0 0.0
    %115 = vmatpush1.xpose.msra.mxu0 0.0
    %116 = vmatprep.subr.mxu0 0.0
    %117 = vmatpush1.xpose.msra.mxu0 0.0
    %118 = vmatprep.subr.mxu0 0.0
    %119 = vmatpush1.xpose.msra.mxu0 0.0
    %120 = vmatprep.subr.mxu0 0.0
    %121 = vmatpush1.xpose.msra.mxu0 0.0
    %122 = vmatprep.subr.mxu0 0.0
    %123 = vmatpush1.xpose.msra.mxu0 0.0
    %124 = vmatprep.subr.mxu0 0.0
    %125 = vmatpush1.xpose.msra.mxu0 0.0
    %126 = vmatprep.subr.mxu0 0.0
    %127 = vmatpush1.xpose.msra.mxu0 0.0
    %128 = vmatprep.subr.mxu0 0.0
    %129 = vmatpush1.xpose.msra.mxu0 0.0
    %130 = vmatprep.subr.mxu0 0.0
    %131 = vmatpush1.xpose.msra.mxu0 0.0
    %132 = vmatprep.subr.mxu0 0.0
    %133 = vmatpush1.xpose.msra.mxu0 0.0
    %134 = vmatprep.subr.mxu0 0.0
    %135 = vmatpush1.xpose.msra.mxu0 0.0
    %136 = vmatprep.subr.mxu0 0.0
    %137 = vmatpush1.xpose.msra.mxu0 0.0
    %138 = vmatprep.subr.mxu0 0.0
    %139 = vmatpush1.xpose.msra.mxu0 0.0
    %140 = vmatprep.mubr.f32.mxu0 0.0
    %141 = vmatmul.mubr.f32.gmra.mrb[0].mxu0 %v58
    %v142 = vpop.f32.mrb[0].mxu0
    %v143 = vadd.f32 0.0, %v142
    %v144 = vpop.f32.mrb[0].mxu0
    %145 = vmatprep.mubr.f32.mxu0 0.0
    %146 = vmatmul.mubr.f32.gmra.mrb[0].mxu0 %v59
    %v147 = vpop.f32.mrb[0].mxu0
    %v148 = vadd.f32 0.0, %v147
    %v149 = vpop.f32.mrb[0].mxu0
    %150 = vdwg.mxu0
    %v151 = vadd.f32 %v56, %v143
    %v152 = vadd.f32 %v57, %v148
    %153 = vst [vmem:[#allocation2] sm:$0xff] %v151
    %154 = vst [vmem:[#allocation2 + $0x8] sm:$0xff] %v152
    // Predicated region
    $region26: #{tpu_custom_call.1} parent=1 // pred_check
      %p155 = pneg %p43
    $region27: #{tpu_custom_call.1} parent=1 // pred_check_branch
      %157 = sbr.rel (%p155) target = $region29
    $region28: #{tpu_custom_call.1} parent=1 // pred_region
      %v158 = vld [vmem:[#allocation2] sm:$0xff]
      %v159 = vld [vmem:[#allocation2 + $0x8] sm:$0xff]
      %160 = vst [vmem:[#allocation8] sm:$0xff] %v158
      %161 = vst [vmem:[#allocation8 + $0x8] sm:$0xff] %v159
    $region29: #{tpu_custom_call.1} parent=1 // pred_fallthru
      _
    // Predicated region
    $region30: #{tpu_custom_call.1} parent=1 // pred_check
      _
    $region31: #{tpu_custom_call.1} parent=1 // pred_check_branch
      %163 = sbr.rel (0) target = $region33
    $region32: #{tpu_custom_call.1} parent=1 // pred_region
      %s165 = ssub.s32 256, 256
      %166 = vsyncadd [#allocation5], %s165
      %s167 = sshll.u32 [#allocation8], 4
      %s168 = int_to_ptr.vmem [resolvable:$true] %s167
      %173 = dma.vmem_to_hbm [thread:$0]  %s168, 256, %s3, [#allocation5], 128, 128, 8
    $region33: #{tpu_custom_call.1} parent=1 // pred_fallthru
      _
    // Predicated region
    $region34: #{tpu_custom_call.1} parent=1 // pred_check
      _
    $region35: #{tpu_custom_call.1} parent=1 // pred_check_branch
      %175 = sbr.rel (0) target = $region37
    $region36: #{tpu_custom_call.1} parent=1 // pred_region
      %176 = dma.done [#allocation5], 256
    $region37: #{tpu_custom_call.1} parent=1 // pred_fallthru
      _
    %177 = vsyncpa [#allocation4], 1
    %178 = vsyncpa [#allocation7], 1
    %179 = vsyncpa [#allocation5], 1

</llo_original>
